<compile_context>
chip_gen: v6e
topology: v6e:2x2x1
jax: 0.10.0
libtpu: 0.0.40
codegen_flags: <defaults>
</compile_context>

<pallas_src>
import jax
import jax.numpy as jnp
import numpy as np
from jax import lax
from jax.experimental import pallas as pl
from jax.experimental.pallas import tpu as pltpu

OBS_DIM = 8
NHIDDEN = 32
LATENT_DIM = 4
HID = OBS_DIM + NHIDDEN          # fc1 output width = 40
BATCH = 256                      # lane dimension (multiple of 128 -> unmasked stores)

NUM_STEPS = 8                    # fused-Euler demo: evaluations per pallas_call
DT = 0.05


def _elu(x):
    # ELU(alpha=1): x if x > 0 else exp(x) - 1.  Clamp the exp argument so the
    # unselected branch never produces inf.
    return jnp.where(x > 0.0, x, jnp.exp(jnp.minimum(x, 0.0)) - 1.0)


def _odefunc_transposed(xT, w1, b1, w2, b2):
    """One module forward pass in feature-major layout: xT is (LATENT_DIM, B)."""
    h = jnp.dot(w1, xT, preferred_element_type=jnp.float32) + b1   # (HID, B)
    h = _elu(h)
    return jnp.dot(w2, h, preferred_element_type=jnp.float32) + b2  # (LATENT_DIM, B)


def _latent_odefunc_kernel(xT_ref, w1_ref, b1_ref, w2_ref, b2_ref, out_ref):
    # Single forward evaluation.  Everything is a full-array VMEM block.
    out_ref[...] = _odefunc_transposed(
        xT_ref[...], w1_ref[...], b1_ref[...], w2_ref[...], b2_ref[...]
    ).astype(out_ref.dtype)


def _fused_euler_kernel(xT_ref, w1_ref, b1_ref, w2_ref, b2_ref, out_ref):
    # NUM_STEPS explicit-Euler steps fused into one launch; weights are read
    # once and stay in vregs/VMEM across the (unrolled) loop.
    w1 = w1_ref[...]
    b1 = b1_ref[...]
    w2 = w2_ref[...]
    b2 = b2_ref[...]

    def body(_, xT):
        return xT + DT * _odefunc_transposed(xT, w1, b1, w2, b2)

    out_ref[...] = lax.fori_loop(0, NUM_STEPS, body, xT_ref[...], unroll=True)


def _full_block_specs(B):
    # Full-array blocks, constant index maps -> fetched once, VMEM resident.
    in_specs = [
        pl.BlockSpec((LATENT_DIM, B), lambda i: (0, 0)),   # x^T
        pl.BlockSpec((HID, LATENT_DIM), lambda i: (0, 0)),  # W1 (out, in)
        pl.BlockSpec((HID, 1), lambda i: (0, 0)),           # b1 column
        pl.BlockSpec((LATENT_DIM, HID), lambda i: (0, 0)),  # W2 (out, in)
        pl.BlockSpec((LATENT_DIM, 1), lambda i: (0, 0)),    # b2 column
    ]
    out_spec = pl.BlockSpec((LATENT_DIM, B), lambda i: (0, 0))
    return in_specs, out_spec


def _call(kernel, x, params):
    """Shared wrapper: transpose to feature-major, run, transpose back."""
    w1, b1, w2, b2 = params
    B = x.shape[0]
    xT = x.T                                   # (LATENT_DIM, B): batch on lanes
    b1c = b1.reshape(HID, 1)
    b2c = b2.reshape(LATENT_DIM, 1)
    in_specs, out_spec = _full_block_specs(B)

    outT = pl.pallas_call(
        kernel,
        out_shape=jax.ShapeDtypeStruct((LATENT_DIM, B), jnp.float32),
        grid=(1,),                             # single step: no per-step overhead
        in_specs=in_specs,
        out_specs=out_spec,
        compiler_params=pltpu.CompilerParams(
            dimension_semantics=("arbitrary",)
        ),
    )(xT, w1, b1c, w2, b2c)
    return outT.T                              # back to (B, LATENT_DIM)


def latent_odefunc(x, params):
    """Module forward pass. x: (B, LATENT_DIM) f32.
    params = (w1, b1, w2, b2) in PyTorch nn.Linear layout:
      w1 (HID, LATENT_DIM), b1 (HID,), w2 (LATENT_DIM, HID), b2 (LATENT_DIM,)."""
    return _call(_latent_odefunc_kernel, x, params)


def latent_odefunc_fused_euler(x, params):
    """NUM_STEPS explicit-Euler steps x <- x + DT * f(x) fused into one
    pallas_call (launch/DMA-setup amortization per the performance review)."""
    return _call(_fused_euler_kernel, x, params)


def _reference_forward(x, params):
    w1, b1, w2, b2 = params
    h = x @ w1.T + b1
    h = jnp.where(h > 0.0, h, jnp.exp(jnp.minimum(h, 0.0)) - 1.0)
    return h @ w2.T + b2


if __name__ == "__main__":
    key = jax.random.PRNGKey(0)
    k_x, k_w1, k_b1, k_w2, k_b2 = jax.random.split(key, 5)

    # Batched latent states (batch of trajectories / ODE states).
    x = jax.random.normal(k_x, (BATCH, LATENT_DIM), dtype=jnp.float32)

    # Parameters in PyTorch nn.Linear layout: weight (out, in), bias (out,).
    w1 = jax.random.normal(k_w1, (HID, LATENT_DIM), dtype=jnp.float32) * 0.1
    b1 = jax.random.normal(k_b1, (HID,), dtype=jnp.float32) * 0.1
    w2 = jax.random.normal(k_w2, (LATENT_DIM, HID), dtype=jnp.float32) * 0.1
    b2 = jax.random.normal(k_b2, (LATENT_DIM,), dtype=jnp.float32) * 0.1
    params = (w1, b1, w2, b2)

    # 1) Single forward evaluation (exact module semantics).
    out = latent_odefunc(x, params)
    jax.block_until_ready(out)
    out_ref = _reference_forward(x, params)
    np.testing.assert_allclose(
        np.asarray(out), np.asarray(out_ref), rtol=1e-5, atol=1e-5
    )

    # 2) Fused multi-evaluation kernel (launch-cost amortization).
    xN = latent_odefunc_fused_euler(x, params)
    jax.block_until_ready(xN)
    xN_ref = x
    for _ in range(NUM_STEPS):
        xN_ref = xN_ref + DT * _reference_forward(xN_ref, params)
    np.testing.assert_allclose(
        np.asarray(xN), np.asarray(xN_ref), rtol=1e-4, atol=1e-5
    )

    print("KERNEL_OK")
</pallas_src>

<mosaic_0001>
module attributes {stable_mosaic.version = 11 : i64} {
  func.func @_latent_odefunc_kernel(%arg0: i32, %arg1: memref<4x256xf32, #tpu.memory_space<vmem>>, %arg2: memref<40x4xf32, #tpu.memory_space<vmem>>, %arg3: memref<40x1xf32, #tpu.memory_space<vmem>>, %arg4: memref<4x40xf32, #tpu.memory_space<vmem>>, %arg5: memref<4x1xf32, #tpu.memory_space<vmem>>, %arg6: memref<4x256xf32, #tpu.memory_space<vmem>>) attributes {dimension_semantics = [#tpu.dimension_semantics<arbitrary>], iteration_bounds = array<i64: 1>, scalar_prefetch = 0 : i64, scratch_operands = 0 : i64, tpu.core_type = #tpu.core_type<tc>, window_params = [{pipeline_mode = #tpu.pipeline_mode<synchronous>, transform_indices = @transform_0, window_bounds = array<i64: 4, 256>}, {pipeline_mode = #tpu.pipeline_mode<synchronous>, transform_indices = @transform_1, window_bounds = array<i64: 40, 4>}, {pipeline_mode = #tpu.pipeline_mode<synchronous>, transform_indices = @transform_2, window_bounds = array<i64: 40, 1>}, {pipeline_mode = #tpu.pipeline_mode<synchronous>, transform_indices = @transform_3, window_bounds = array<i64: 4, 40>}, {pipeline_mode = #tpu.pipeline_mode<synchronous>, transform_indices = @transform_4, window_bounds = array<i64: 4, 1>}, {pipeline_mode = #tpu.pipeline_mode<synchronous>, transform_indices = @transform_5, window_bounds = array<i64: 4, 256>}]} {
    %c0 = arith.constant 0 : index
    %c0_0 = arith.constant 0 : index
    %0 = vector.load %arg1[%c0, %c0_0] : memref<4x256xf32, #tpu.memory_space<vmem>>, vector<4x256xf32>
    %c0_1 = arith.constant 0 : index
    %c0_2 = arith.constant 0 : index
    %1 = vector.load %arg2[%c0_1, %c0_2] : memref<40x4xf32, #tpu.memory_space<vmem>>, vector<40x4xf32>
    %c0_3 = arith.constant 0 : index
    %c0_4 = arith.constant 0 : index
    %2 = vector.load %arg3[%c0_3, %c0_4] : memref<40x1xf32, #tpu.memory_space<vmem>>, vector<40x1xf32>
    %c0_5 = arith.constant 0 : index
    %c0_6 = arith.constant 0 : index
    %3 = vector.load %arg4[%c0_5, %c0_6] : memref<4x40xf32, #tpu.memory_space<vmem>>, vector<4x40xf32>
    %c0_7 = arith.constant 0 : index
    %c0_8 = arith.constant 0 : index
    %4 = vector.load %arg5[%c0_7, %c0_8] : memref<4x1xf32, #tpu.memory_space<vmem>>, vector<4x1xf32>
    %cst = arith.constant dense<0.000000e+00> : vector<40x256xf32>
    %5 = tpu.matmul %1, %0, %cst {dimension_numbers = #tpu.dot_dimension_numbers<[1], [0], [0], [1], [0, 0, 1, 1], [], []>} : vector<40x4xf32>, vector<4x256xf32>, vector<40x256xf32> -> vector<40x256xf32>
    %6 = vector.broadcast %2 : vector<40x1xf32> to vector<40x256xf32>
    %7 = arith.addf %5, %6 : vector<40x256xf32>
    %cst_9 = arith.constant 0.000000e+00 : f32
    %8 = vector.broadcast %cst_9 : f32 to vector<40x256xf32>
    %9 = arith.cmpf ogt, %7, %8 : vector<40x256xf32>
    %cst_10 = arith.constant 0.000000e+00 : f32
    %10 = vector.broadcast %cst_10 : f32 to vector<40x256xf32>
    %11 = arith.minimumf %7, %10 : vector<40x256xf32>
    %12 = math.exp %11 : vector<40x256xf32>
    %cst_11 = arith.constant 1.000000e+00 : f32
    %13 = vector.broadcast %cst_11 : f32 to vector<40x256xf32>
    %14 = arith.subf %12, %13 : vector<40x256xf32>
    %15 = arith.select %9, %7, %14 : vector<40x256xi1>, vector<40x256xf32>
    %cst_12 = arith.constant dense<0.000000e+00> : vector<4x256xf32>
    %16 = tpu.matmul %3, %15, %cst_12 {dimension_numbers = #tpu.dot_dimension_numbers<[1], [0], [0], [1], [0, 0, 1, 1], [], []>} : vector<4x40xf32>, vector<40x256xf32>, vector<4x256xf32> -> vector<4x256xf32>
    %17 = vector.broadcast %4 : vector<4x1xf32> to vector<4x256xf32>
    %18 = arith.addf %16, %17 : vector<4x256xf32>
    %c0_13 = arith.constant 0 : index
    %c0_14 = arith.constant 0 : index
    %19 = vector.load %arg6[%c0_13, %c0_14] : memref<4x256xf32, #tpu.memory_space<vmem>>, vector<4x256xf32>
    tpu.vector_store %arg6[%c0_13, %c0_14], %18 {strides = array<i32>} : memref<4x256xf32, #tpu.memory_space<vmem>>, vector<4x256xf32>,
    return
  }
  func.func @transform_0(%arg0: i32) -> (i32, i32) {
    %c0_i32 = arith.constant 0 : i32
    %c0_i32_0 = arith.constant 0 : i32
    %c0_i32_1 = arith.constant 0 : i32
    return %c0_i32, %c0_i32_0 : i32, i32
  }
  func.func @transform_1(%arg0: i32) -> (i32, i32) {
    %c0_i32 = arith.constant 0 : i32
    %c0_i32_0 = arith.constant 0 : i32
    %c0_i32_1 = arith.constant 0 : i32
    return %c0_i32, %c0_i32_0 : i32, i32
  }
  func.func @transform_2(%arg0: i32) -> (i32, i32) {
    %c0_i32 = arith.constant 0 : i32
    %c0_i32_0 = arith.constant 0 : i32
    %c0_i32_1 = arith.constant 0 : i32
    return %c0_i32, %c0_i32_0 : i32, i32
  }
  func.func @transform_3(%arg0: i32) -> (i32, i32) {
    %c0_i32 = arith.constant 0 : i32
    %c0_i32_0 = arith.constant 0 : i32
    %c0_i32_1 = arith.constant 0 : i32
    return %c0_i32, %c0_i32_0 : i32, i32
  }
  func.func @transform_4(%arg0: i32) -> (i32, i32) {
    %c0_i32 = arith.constant 0 : i32
    %c0_i32_0 = arith.constant 0 : i32
    %c0_i32_1 = arith.constant 0 : i32
    return %c0_i32, %c0_i32_0 : i32, i32
  }
  func.func @transform_5(%arg0: i32) -> (i32, i32) {
    %c0_i32 = arith.constant 0 : i32
    %c0_i32_0 = arith.constant 0 : i32
    %c0_i32_1 = arith.constant 0 : i32
    return %c0_i32, %c0_i32_0 : i32, i32
  }
}

</mosaic_0001>

<llo_original>
// kernel: tpu_custom_call.1
$region0: #{tpu_custom_call.1}
  #allocation0 [shape = 'u32[]', space=smem, size = 0x4, offset = 0x4, fixed_abs, tag = 'smem constant byte address 0x4 - core index']
  #allocation1 [shape = 'u32[144,128]{1,0:T(1,128)}', space=vmem, size = 0x12000, scoped, tag = 'internal scratch']
  %s0 = inlined_call_operand.vmem [shape: f32[4,256], index: 0, kind: input, shape index: {}]
  %s1 = inlined_call_operand.vmem [shape: f32[40,4], index: 1, kind: input, shape index: {}]
  %s2 = inlined_call_operand.vmem [shape: f32[40,1], index: 2, kind: input, shape index: {}]
  %s3 = inlined_call_operand.vmem [shape: f32[4,40], index: 3, kind: input, shape index: {}]
  %s4 = inlined_call_operand.vmem [shape: f32[4,1], index: 4, kind: input, shape index: {}]
  %s5 = inlined_call_operand.hbm [shape: f32[4,256], index: 5, kind: output, shape index: {}]
  %s6 = sld [smem:[#allocation0]]
  $region30: #{tpu_custom_call.1} parent=0
    _
  %s8 = ssub.s32 1, %s6
  %s9 = scalar_select 0, %s8, %s6
  $region1: #{tpu_custom_call.1} parent=0
    #allocation2 [shape = 'u8[4096]{0}', space=vmem, size = 0x1000, scoped, tag = 'output window, operand 0, single buffered']
    #allocation3 [shape = 's32[1]{0}', space=sflag, size = 0x4, scoped, tag = 'scoped memory for tpu_custom_call.1']
    %10 = vsyncpa [#allocation3], 0
    // Predicated region
    $region2: #{tpu_custom_call.1} parent=1 // pred_check
      _
    $region3: #{tpu_custom_call.1} parent=1 // pred_check_branch
      %12 = sbr.rel (0) target = $region5
    $region4: #{tpu_custom_call.1} parent=1 // pred_region
      _
    $region5: #{tpu_custom_call.1} parent=1 // pred_fallthru
      _
    // Predicated region
    $region6: #{tpu_custom_call.1} parent=1 // pred_check
      _
    $region7: #{tpu_custom_call.1} parent=1 // pred_check_branch
      %14 = sbr.rel (0) target = $region9
    $region8: #{tpu_custom_call.1} parent=1 // pred_region
      _
    $region9: #{tpu_custom_call.1} parent=1 // pred_fallthru
      _
    // Predicated region
    $region10: #{tpu_custom_call.1} parent=1 // pred_check
      _
    $region11: #{tpu_custom_call.1} parent=1 // pred_check_branch
      %16 = sbr.rel (0) target = $region13
    $region12: #{tpu_custom_call.1} parent=1 // pred_region
      _
    $region13: #{tpu_custom_call.1} parent=1 // pred_fallthru
      _
    // Predicated region
    $region14: #{tpu_custom_call.1} parent=1 // pred_check
      _
    $region15: #{tpu_custom_call.1} parent=1 // pred_check_branch
      %18 = sbr.rel (0) target = $region17
    $region16: #{tpu_custom_call.1} parent=1 // pred_region
      _
    $region17: #{tpu_custom_call.1} parent=1 // pred_fallthru
      _
    // Predicated region
    $region18: #{tpu_custom_call.1} parent=1 // pred_check
      _
    $region19: #{tpu_custom_call.1} parent=1 // pred_check_branch
      %20 = sbr.rel (0) target = $region21
    $region20: #{tpu_custom_call.1} parent=1 // pred_region
      _
    $region21: #{tpu_custom_call.1} parent=1 // pred_fallthru
      _
    %v21 = vld [vmem:[%s0] sm:$0xff]
    %v22 = vld [vmem:[%s1] sm:$0xff]
    %v23 = vld [vmem:[%s1 + $0x8] sm:$0xff]
    %v24 = vld [vmem:[%s1 + $0x10] sm:$0xff]
    %v25 = vld [vmem:[%s1 + $0x18] sm:$0xff]
    %v26 = vld [vmem:[%s1 + $0x20] sm:$0xff]
    %v27 = vld [vmem:[%s2] sm:$0xff]
    %v28 = vld [vmem:[%s2 + $0x8] sm:$0xff]
    %v29 = vld [vmem:[%s2 + $0x10] sm:$0xff]
    %v30 = vld [vmem:[%s2 + $0x18] sm:$0xff]
    %v31 = vld [vmem:[%s2 + $0x20] sm:$0xff]
    %v32 = vld [vmem:[%s3] sm:$0xf]
    %v33 = vld [vmem:[%s4] sm:$0xf]
    %35 = vset.pattern.permute.xlu0 0
    %36 = vperm.xlu0 %35, %v27
    %v37 = vpop.permute.xlu0 %36
    %40 = vset.pattern.permute.xlu0 0
    %41 = vperm.xlu0 %40, %v28
    %v42 = vpop.permute.xlu0 %41
    %45 = vset.pattern.permute.xlu0 0
    %46 = vperm.xlu0 %45, %v29
    %v47 = vpop.permute.xlu0 %46
    %50 = vset.pattern.permute.xlu0 0
    %51 = vperm.xlu0 %50, %v30
    %v52 = vpop.permute.xlu0 %51
    %55 = vset.pattern.permute.xlu0 0
    %56 = vperm.xlu0 %55, %v31
    %v57 = vpop.permute.xlu0 %56
    %v60 = vcombine.high %v21, %v21
    %vm61 = vcmask 31744
    %v63 = vsel %vm61, %v22, 0
    %v66 = vsel %vm61, %v23, 0
    %v69 = vsel %vm61, %v24, 0
    %v72 = vsel %vm61, %v25, 0
    %v75 = vsel %vm61, %v26, 0
    %vm77 = vcmask 1043456
    %v78 = vsel %vm77, %v21, 0
    %v80 = vsel %vm77, %v60, 0
    %82 = vmatprep.subr.mxu0 0.0
    %83 = vmatpush1.msra.mxu0 0.0
    %84 = vmatprep.subr.mxu0 0.0
    %85 = vmatpush1.msra.mxu0 0.0
    %86 = vmatprep.subr.mxu0 0.0
    %87 = vmatpush1.msra.mxu0 0.0
    %88 = vmatprep.subr.mxu0 0.0
    %89 = vmatpush1.msra.mxu0 0.0
    %90 = vmatprep.subr.mxu0 0.0
    %91 = vmatpush1.msra.mxu0 0.0
    %92 = vmatprep.subr.mxu0 0.0
    %93 = vmatpush1.msra.mxu0 0.0
    %94 = vmatprep.subr.mxu0 0.0
    %95 = vmatpush1.msra.mxu0 0.0
    %96 = vmatprep.subr.mxu0 0.0
    %97 = vmatpush1.msra.mxu0 0.0
    %98 = vmatprep.subr.mxu0 0.0
    %99 = vmatpush1.msra.mxu0 0.0
    %100 = vmatprep.subr.mxu0 0.0
    %101 = vmatpush1.msra.mxu0 0.0
    %102 = vmatprep.subr.mxu0 0.0
    %103 = vmatpush1.msra.mxu0 0.0
    %104 = vmatprep.subr.mxu0 0.0
    %105 = vmatpush1.msra.mxu0 0.0
    %106 = vmatprep.subr.mxu0 0.0
    %107 = vmatpush1.msra.mxu0 0.0
    %108 = vmatprep.subr.mxu0 0.0
    %109 = vmatpush1.msra.mxu0 0.0
    %110 = vmatprep.subr.mxu0 0.0
    %111 = vmatpush1.msra.mxu0 0.0
    %112 = vmatprep.subr.mxu0 %v80
    %113 = vmatpush1.msra.mxu0 %v78
    %114 = vmatprep.subr.mxu0 0.0
    %115 = vmatpush2.msra.mxu0 0.0
    %116 = vmatprep.subr.mxu0 0.0
    %117 = vmatpush2.msra.mxu0 0.0
    %118 = vmatprep.subr.mxu0 0.0
    %119 = vmatpush2.msra.mxu0 0.0
    %120 = vmatprep.subr.mxu0 0.0
    %121 = vmatpush2.msra.mxu0 0.0
    %122 = vmatprep.subr.mxu0 0.0
    %123 = vmatpush2.msra.mxu0 0.0
    %124 = vmatprep.subr.mxu0 0.0
    %125 = vmatpush2.msra.mxu0 0.0
    %126 = vmatprep.subr.mxu0 0.0
    %127 = vmatpush2.msra.mxu0 0.0
    %128 = vmatprep.subr.mxu0 0.0
    %129 = vmatpush2.msra.mxu0 0.0
    %130 = vmatprep.subr.mxu0 0.0
    %131 = vmatpush2.msra.mxu0 0.0
    %132 = vmatprep.subr.mxu0 0.0
    %133 = vmatpush2.msra.mxu0 0.0
    %134 = vmatprep.subr.mxu0 0.0
    %135 = vmatpush2.msra.mxu0 0.0
    %136 = vmatprep.subr.mxu0 0.0
    %137 = vmatpush2.msra.mxu0 0.0
    %138 = vmatprep.subr.mxu0 0.0
    %139 = vmatpush2.msra.mxu0 0.0
    %140 = vmatprep.subr.mxu0 0.0
    %141 = vmatpush2.msra.mxu0 0.0
    %142 = vmatprep.subr.mxu0 0.0
    %143 = vmatpush2.msra.mxu0 0.0
    %144 = vmatprep.subr.mxu0 0.0
    %145 = vmatpush2.msra.mxu0 0.0
    %146 = vmatprep.mubr.f32.mxu0 0.0
    %147 = vmatmul.mubr.f32.gmra.mxu0 %v63
    %v148 = vpop.f32.mrf.mxu0
    %v149 = vadd.f32 %v37, %v148
    %v150 = vpop.f32.mrf.mxu0
    %v151 = vadd.f32 %v37, %v150
    %152 = vmatprep.mubr.f32.mxu0 0.0
    %153 = vmatmul.mubr.f32.gmra.mxu0 %v66
    %v154 = vpop.f32.mrf.mxu0
    %v155 = vadd.f32 %v42, %v154
    %v156 = vpop.f32.mrf.mxu0
    %v157 = vadd.f32 %v42, %v156
    %158 = vmatprep.mubr.f32.mxu0 0.0
    %159 = vmatmul.mubr.f32.gmra.mxu0 %v69
    %v160 = vpop.f32.mrf.mxu0
    %v161 = vadd.f32 %v47, %v160
    %v162 = vpop.f32.mrf.mxu0
    %v163 = vadd.f32 %v47, %v162
    %164 = vmatprep.mubr.f32.mxu0 0.0
    %165 = vmatmul.mubr.f32.gmra.mxu0 %v72
    %v166 = vpop.f32.mrf.mxu0
    %v167 = vadd.f32 %v52, %v166
    %v168 = vpop.f32.mrf.mxu0
    %v169 = vadd.f32 %v52, %v168
    %170 = vmatprep.mubr.f32.mxu0 0.0
    %171 = vmatmul.mubr.f32.gmra.mxu0 %v75
    %v172 = vpop.f32.mrf.mxu0
    %v173 = vadd.f32 %v57, %v172
    %v174 = vpop.f32.mrf.mxu0
    %v175 = vadd.f32 %v57, %v174
    %176 = vdwg.mxu0
    %vm177 = vcmp.gt.f32.partialorder %v149, 0.0
    %vm178 = vcmp.gt.f32.partialorder %v151, 0.0
    %vm179 = vcmp.gt.f32.partialorder %v155, 0.0
    %vm180 = vcmp.gt.f32.partialorder %v157, 0.0
    %vm181 = vcmp.gt.f32.partialorder %v161, 0.0
    %vm182 = vcmp.gt.f32.partialorder %v163, 0.0
    %vm183 = vcmp.gt.f32.partialorder %v167, 0.0
    %vm184 = vcmp.gt.f32.partialorder %v169, 0.0
    %vm185 = vcmp.gt.f32.partialorder %v173, 0.0
    %vm186 = vcmp.gt.f32.partialorder %v175, 0.0
    %v187 = vmin.f32 %v149, 0.0
    %v188 = vmin.f32 %v151, 0.0
    %v189 = vmin.f32 %v155, 0.0
    %v190 = vmin.f32 %v157, 0.0
    %v191 = vmin.f32 %v161, 0.0
    %v192 = vmin.f32 %v163, 0.0
    %v193 = vmin.f32 %v167, 0.0
    %v194 = vmin.f32 %v169, 0.0
    %v195 = vmin.f32 %v173, 0.0
    %v196 = vmin.f32 %v175, 0.0
    %v197 = vmul.f32 %v187, 1.442695
    %v198 = vpow.pop %v197
    %v199 = vmul.f32 %v188, 1.442695
    %v200 = vpow.pop %v199
    %v201 = vmul.f32 %v189, 1.442695
    %v202 = vpow.pop %v201
    %v203 = vmul.f32 %v190, 1.442695
    %v204 = vpow.pop %v203
    %v205 = vmul.f32 %v191, 1.442695
    %v206 = vpow.pop %v205
    %v207 = vmul.f32 %v192, 1.442695
    %v208 = vpow.pop %v207
    %v209 = vmul.f32 %v193, 1.442695
    %v210 = vpow.pop %v209
    %v211 = vmul.f32 %v194, 1.442695
    %v212 = vpow.pop %v211
    %v213 = vmul.f32 %v195, 1.442695
    %v214 = vpow.pop %v213
    %v215 = vmul.f32 %v196, 1.442695
    %v216 = vpow.pop %v215
    %v217 = vsub.f32 %v198, 1.0
    %v218 = vsub.f32 %v200, 1.0
    %v219 = vsub.f32 %v202, 1.0
    %v220 = vsub.f32 %v204, 1.0
    %v221 = vsub.f32 %v206, 1.0
    %v222 = vsub.f32 %v208, 1.0
    %v223 = vsub.f32 %v210, 1.0
    %v224 = vsub.f32 %v212, 1.0
    %v225 = vsub.f32 %v214, 1.0
    %v226 = vsub.f32 %v216, 1.0
    %v227 = vsel %vm177, %v149, %v217
    %v228 = vsel %vm178, %v151, %v218
    %v229 = vsel %vm179, %v155, %v219
    %v230 = vsel %vm180, %v157, %v220
    %v231 = vsel %vm181, %v161, %v221
    %v232 = vsel %vm182, %v163, %v222
    %v233 = vsel %vm183, %v167, %v223
    %v234 = vsel %vm184, %v169, %v224
    %v235 = vsel %vm185, %v173, %v225
    %v236 = vsel %vm186, %v175, %v226
    %238 = vset.pattern.permute.xlu0 0
    %239 = vperm.xlu0 %238, %v33
    %v240 = vpop.permute.xlu0 %239
    %vm242 = vcmask 326656
    %v244 = vsel %vm242, %v32, 0
    %246 = vmatprep.subr.mxu0 0.0
    %247 = vmatpush1.msra.mxu0 0.0
    %248 = vmatprep.subr.mxu0 0.0
    %249 = vmatpush1.msra.mxu0 0.0
    %250 = vmatprep.subr.mxu0 0.0
    %251 = vmatpush1.msra.mxu0 0.0
    %252 = vmatprep.subr.mxu0 0.0
    %253 = vmatpush1.msra.mxu0 0.0
    %254 = vmatprep.subr.mxu0 0.0
    %255 = vmatpush1.msra.mxu0 0.0
    %256 = vmatprep.subr.mxu0 0.0
    %257 = vmatpush1.msra.mxu0 0.0
    %258 = vmatprep.subr.mxu0 0.0
    %259 = vmatpush1.msra.mxu0 0.0
    %260 = vmatprep.subr.mxu0 0.0
    %261 = vmatpush1.msra.mxu0 0.0
    %262 = vmatprep.subr.mxu0 0.0
    %263 = vmatpush1.msra.mxu0 0.0
    %264 = vmatprep.subr.mxu0 0.0
    %265 = vmatpush1.msra.mxu0 0.0
    %266 = vmatprep.subr.mxu0 0.0
    %267 = vmatpush1.msra.mxu0 0.0
    %268 = vmatprep.subr.mxu0 %v236
    %269 = vmatpush1.msra.mxu0 %v235
    %270 = vmatprep.subr.mxu0 %v234
    %271 = vmatpush1.msra.mxu0 %v233
    %272 = vmatprep.subr.mxu0 %v232
    %273 = vmatpush1.msra.mxu0 %v231
    %274 = vmatprep.subr.mxu0 %v230
    %275 = vmatpush1.msra.mxu0 %v229
    %276 = vmatprep.subr.mxu0 %v228
    %277 = vmatpush1.msra.mxu0 %v227
    %278 = vmatprep.subr.mxu0 0.0
    %279 = vmatpush2.msra.mxu0 0.0
    %280 = vmatprep.subr.mxu0 0.0
    %281 = vmatpush2.msra.mxu0 0.0
    %282 = vmatprep.subr.mxu0 0.0
    %283 = vmatpush2.msra.mxu0 0.0
    %284 = vmatprep.subr.mxu0 0.0
    %285 = vmatpush2.msra.mxu0 0.0
    %286 = vmatprep.subr.mxu0 0.0
    %287 = vmatpush2.msra.mxu0 0.0
    %288 = vmatprep.subr.mxu0 0.0
    %289 = vmatpush2.msra.mxu0 0.0
    %290 = vmatprep.subr.mxu0 0.0
    %291 = vmatpush2.msra.mxu0 0.0
    %292 = vmatprep.subr.mxu0 0.0
    %293 = vmatpush2.msra.mxu0 0.0
    %294 = vmatprep.subr.mxu0 0.0
    %295 = vmatpush2.msra.mxu0 0.0
    %296 = vmatprep.subr.mxu0 0.0
    %297 = vmatpush2.msra.mxu0 0.0
    %298 = vmatprep.subr.mxu0 0.0
    %299 = vmatpush2.msra.mxu0 0.0
    %300 = vmatprep.subr.mxu0 0.0
    %301 = vmatpush2.msra.mxu0 0.0
    %302 = vmatprep.subr.mxu0 0.0
    %303 = vmatpush2.msra.mxu0 0.0
    %304 = vmatprep.subr.mxu0 0.0
    %305 = vmatpush2.msra.mxu0 0.0
    %306 = vmatprep.subr.mxu0 0.0
    %307 = vmatpush2.msra.mxu0 0.0
    %308 = vmatprep.subr.mxu0 0.0
    %309 = vmatpush2.msra.mxu0 0.0
    %310 = vmatprep.mubr.f32.mxu0 0.0
    %311 = vmatmul.mubr.f32.gmra.mxu0 %v244
    %v312 = vpop.f32.mrf.mxu0
    %v313 = vadd.f32 %v240, %v312
    %v314 = vpop.f32.mrf.mxu0
    %v315 = vadd.f32 %v240, %v314
    %316 = vdwg.mxu0
    %v319 = vcombine.low %v313, %v315
    %321 = vst [vmem:[#allocation2] sm:$0xff] %v319
    // Predicated region
    $region22: #{tpu_custom_call.1} parent=1 // pred_check
      _
    $region23: #{tpu_custom_call.1} parent=1 // pred_check_branch
      %323 = sbr.rel (0) target = $region25
    $region24: #{tpu_custom_call.1} parent=1 // pred_region
      %s325 = ssub.s32 128, 128
      %326 = vsyncadd [#allocation3], %s325
      %s328 = sshll.u32 [#allocation2], 4
      %s329 = int_to_ptr.vmem [resolvable:$true] %s328
      %331 = dma.vmem_to_hbm [thread:$0]  %s329, 128, %s5, [#allocation3]
    $region25: #{tpu_custom_call.1} parent=1 // pred_fallthru
      _
    // Predicated region
    $region26: #{tpu_custom_call.1} parent=1 // pred_check
      _
    $region27: #{tpu_custom_call.1} parent=1 // pred_check_branch
      %333 = sbr.rel (0) target = $region29
    $region28: #{tpu_custom_call.1} parent=1 // pred_region
      %334 = dma.done [#allocation3], 128
    $region29: #{tpu_custom_call.1} parent=1 // pred_fallthru
      _
    %335 = vsyncpa [#allocation3], 1

</llo_original>
